<compile_context>
chip_gen: v7x
topology: tpu7x:2x2x1
jax: 0.10.0
libtpu: 0.0.40
codegen_flags: <defaults>
</compile_context>

<pallas_src>
import functools

import jax
import jax.numpy as jnp
from jax.experimental import pallas as pl
from jax.experimental.pallas import tpu as pltpu


# ----------------------------------------------------------------------------
# Kernel 1: preprocess_obs  (x.float() / 255.0)
# ----------------------------------------------------------------------------
_LANES = 128
_SUBLANE_ALIGN = 32        # sublane multiple safe for 8-bit inputs ((32,128) native tiling)
_MAX_TILE_ROWS = 1024      # 1024x128 block: 128 KiB u8 in + 512 KiB f32 out per buffer


def _preprocess_kernel(x_ref, o_ref):
    # Cast happens in-kernel; multiply-by-constant keeps it in the VALU slots.
    o_ref[...] = x_ref[...].astype(jnp.float32) * jnp.float32(1.0 / 255.0)


@jax.jit
def _preprocess_impl(obs):
    orig_shape = obs.shape
    total = obs.size

    rows_raw = pl.cdiv(total, _LANES)
    rows_aligned = pl.cdiv(rows_raw, _SUBLANE_ALIGN) * _SUBLANE_ALIGN
    tile_rows = rows_aligned if rows_aligned <= _MAX_TILE_ROWS else _MAX_TILE_ROWS
    rows = pl.cdiv(rows_aligned, tile_rows) * tile_rows
    padded = rows * _LANES

    flat = obs.reshape(-1)
    if padded != total:           # static decision; skipped for aligned shapes
        flat = jnp.pad(flat, (0, padded - total))
    x2d = flat.reshape(rows, _LANES)

    out2d = pl.pallas_call(
        _preprocess_kernel,
        out_shape=jax.ShapeDtypeStruct((rows, _LANES), jnp.float32),
        grid_spec=pltpu.PrefetchScalarGridSpec(
            num_scalar_prefetch=0,
            grid=(rows // tile_rows,),
            in_specs=[pl.BlockSpec((tile_rows, _LANES), lambda i: (i, 0))],
            out_specs=pl.BlockSpec((tile_rows, _LANES), lambda i: (i, 0)),
        ),
        compiler_params=pltpu.CompilerParams(
            dimension_semantics=("parallel",)),
    )(x2d)

    if padded != total:
        return out2d.reshape(-1)[:total].reshape(orig_shape)
    return out2d.reshape(orig_shape)


def preprocess_obs_pallas(obs):
    """obs: uint8 pixel array (NCHW). Returns float32 array of the same shape."""
    return _preprocess_impl(jnp.asarray(obs))


# ----------------------------------------------------------------------------
# Kernel 2: policy  (batched torch.randint-equivalent: 1024 actions per launch)
# ----------------------------------------------------------------------------
_ACTION_BLOCK = (8, 128)   # one vreg of int32 actions = 1024 actions per launch


def _policy_batch_kernel(seed_ref, o_ref, *, action_dims):
    shape = o_ref.shape
    r = jax.lax.broadcasted_iota(jnp.int32, shape, 0)
    c = jax.lax.broadcasted_iota(jnp.int32, shape, 1)
    idx = (r * shape[1] + c).astype(jnp.uint32)

    # Counter-based splitmix32-style hash: only plain 32-bit integer ops, so it
    # lowers on TPU (VPU) and in interpret mode (no TPU-only PRNG primitives).
    x = idx + seed_ref[0].astype(jnp.uint32) * jnp.uint32(0x9E3779B9)
    x = (x ^ (x >> jnp.uint32(16))) * jnp.uint32(0x7FEB352D)
    x = (x ^ (x >> jnp.uint32(15))) * jnp.uint32(0x846CA68B)
    x = x ^ (x >> jnp.uint32(16))

    # top 24 bits -> uniform [0, 1) exactly representable in f32 -> [0, action_dims)
    u = (x >> jnp.uint32(8)).astype(jnp.float32) * jnp.float32(1.0 / float(1 << 24))
    act = jnp.floor(u * jnp.float32(action_dims))
    act = jnp.minimum(act, jnp.float32(action_dims - 1))
    o_ref[...] = act.astype(jnp.int32)


def policy_batch_pallas(action_dims, epoch):
    """Returns 1024 i.i.d. uniform actions in [0, action_dims) for the given epoch."""
    seed_arr = jnp.asarray([epoch], dtype=jnp.int32)
    out = pl.pallas_call(
        functools.partial(_policy_batch_kernel, action_dims=action_dims),
        out_shape=jax.ShapeDtypeStruct(_ACTION_BLOCK, jnp.int32),
        in_specs=[pl.BlockSpec(memory_space=pltpu.SMEM)],
        out_specs=pl.BlockSpec(memory_space=pltpu.VMEM),
    )(seed_arr)
    return out.reshape(-1)


# ----------------------------------------------------------------------------
# Module-equivalent wrapper
# ----------------------------------------------------------------------------
class APIPallas:
    def __init__(self, obs_dims, model_dims, action_dims):
        self.action_dims = action_dims
        self._epoch = 0
        self._action_cache = None
        self._cache_pos = 0

    def preprocess_obs(self, obs):
        return preprocess_obs_pallas(obs)

    def forward(self, obs, reward):
        # Reference forward is `pass` -> returns None.
        return None

    def start_episode(self):
        # Reference is a no-op; the action stream keeps advancing (no repeated sequences).
        pass

    def policy(self, obs, reward):
        if (self._action_cache is None
                or self._cache_pos >= self._action_cache.shape[0]):
            self._epoch += 1
            self._action_cache = jax.device_get(
                policy_batch_pallas(self.action_dims, self._epoch))
            self._cache_pos = 0
        action = int(self._action_cache[self._cache_pos])
        self._cache_pos += 1
        return action


if __name__ == "__main__":
    key = jax.random.PRNGKey(0)
    obs_dims = (4, 16, 16)      # C, H, W
    model_dims = 32
    action_dims = 6
    batch = 2

    # deterministic synthetic uint8 pixel observations, NCHW
    obs = jax.random.randint(
        key, (batch,) + obs_dims, 0, 256, dtype=jnp.int32).astype(jnp.uint8)

    api = APIPallas(obs_dims, model_dims, action_dims)
    api.start_episode()

    pre = jax.block_until_ready(api.preprocess_obs(obs))

    # correctness check against reference semantics: obs.float() / 255.0
    ref = obs.astype(jnp.float32) / 255.0
    assert pre.shape == obs.shape and pre.dtype == jnp.float32
    assert bool(jnp.allclose(pre, ref, atol=1e-6))

    fwd = api.forward(pre, reward=0.0)
    assert fwd is None

    actions = [api.policy(pre, reward=0.0) for _ in range(16)]
    assert all(isinstance(a, int) and 0 <= a < action_dims for a in actions)
    assert len(set(actions)) > 1   # sanity: not degenerate

    print("KERNEL_OK")
</pallas_src>

<mosaic_0001>
module attributes {stable_mosaic.version = 11 : i64} {
  func.func @_preprocess_kernel(%arg0: i32, %arg1: memref<32x128xi8, #tpu.memory_space<vmem>>, %arg2: memref<32x128xf32, #tpu.memory_space<vmem>>) attributes {dimension_semantics = [#tpu.dimension_semantics<parallel>], iteration_bounds = array<i64: 1>, scalar_prefetch = 0 : i64, scratch_operands = 0 : i64, tpu.core_type = #tpu.core_type<tc>, window_params = [{transform_indices = @transform_0, window_bounds = array<i64: 32, 128>}, {transform_indices = @transform_1, window_bounds = array<i64: 32, 128>}]} {
    %c0 = arith.constant 0 : index
    %c0_0 = arith.constant 0 : index
    %0 = vector.load %arg1[%c0, %c0_0] : memref<32x128xi8, #tpu.memory_space<vmem>>, vector<32x128xi8>
    %1 = arith.uitofp %0 : vector<32x128xi8> to vector<32x128xf32>
    %cst = arith.constant 0.00392156886 : f32
    %2 = vector.broadcast %cst : f32 to vector<32x128xf32>
    %3 = arith.mulf %1, %2 : vector<32x128xf32>
    %c0_1 = arith.constant 0 : index
    %c0_2 = arith.constant 0 : index
    %4 = vector.load %arg2[%c0_1, %c0_2] : memref<32x128xf32, #tpu.memory_space<vmem>>, vector<32x128xf32>
    tpu.vector_store %arg2[%c0_1, %c0_2], %3 {strides = array<i32>} : memref<32x128xf32, #tpu.memory_space<vmem>>, vector<32x128xf32>,
    return
  }
  func.func @transform_0(%arg0: i32) -> (i32, i32) {
    %c0_i32 = arith.constant 0 : i32
    %c0_i32_0 = arith.constant 0 : i32
    return %arg0, %c0_i32 : i32, i32
  }
  func.func @transform_1(%arg0: i32) -> (i32, i32) {
    %c0_i32 = arith.constant 0 : i32
    %c0_i32_0 = arith.constant 0 : i32
    return %arg0, %c0_i32 : i32, i32
  }
}

</mosaic_0001>

<llo_original>
// kernel: _preprocess_impl.1
$region0: #{_preprocess_impl.1}
  #allocation0 [shape = 'u32[]', space=smem, size = 0x4, offset = 0x4, fixed_abs, tag = 'smem constant byte address 0x4 - core index']
  #allocation1 [shape = 'u32[144,128]{1,0:T(1,128)}', space=vmem, size = 0x12000, scoped, tag = 'internal scratch']
  %s0 = inlined_call_operand.vmem [shape: u8[32,128], index: 0, kind: input, shape index: {}]
  %s1 = inlined_call_operand.vmem [shape: f32[32,128], index: 1, kind: output, shape index: {}]
  %s2 = sld [smem:[#allocation0]]
  $region14: #{_preprocess_impl.1} parent=0
    _
  %s4 = ssub.s32 1, %s2
  %s5 = scalar_select 0, %s4, %s2
  // Predicated region
  $region2: #{_preprocess_impl.1} parent=0 // pred_check
    _
  $region3: #{_preprocess_impl.1} parent=0 // pred_check_branch
    %7 = sbr.rel (0) target = $region5
  $region4: #{_preprocess_impl.1} parent=0 // pred_region
    _
  $region5: #{_preprocess_impl.1} parent=0 // pred_fallthru
    _
  %v8 = vld [vmem:[%s0] sm:$0xff]
  %v9 = vunpack.c.0.s8 %v8
  %v10 = vunpack.c.1.s8 %v8
  %v11 = vunpack.c.2.s8 %v8
  %v12 = vunpack.c.3.s8 %v8
  %v13 = vand.u32 %v9, 255
  %v14 = vand.u32 %v10, 255
  %v15 = vand.u32 %v11, 255
  %v16 = vand.u32 %v12, 255
  %v17 = vcvt.s32.f32 %v13
  %v18 = vcvt.s32.f32 %v14
  %v19 = vcvt.s32.f32 %v15
  %v20 = vcvt.s32.f32 %v16
  %v21 = vmul.f32 %v17, 0.003921569
  %v22 = vmul.f32 %v18, 0.003921569
  %v23 = vmul.f32 %v19, 0.003921569
  %v24 = vmul.f32 %v20, 0.003921569
  %25 = vst [vmem:[%s1] sm:$0xff] %v21
  %26 = vst [vmem:[%s1 + $0x8] sm:$0xff] %v22
  %27 = vst [vmem:[%s1 + $0x10] sm:$0xff] %v23
  %28 = vst [vmem:[%s1 + $0x18] sm:$0xff] %v24
  // Predicated region
  $region6: #{_preprocess_impl.1} parent=0 // pred_check
    _
  $region7: #{_preprocess_impl.1} parent=0 // pred_check_branch
    %30 = sbr.rel (0) target = $region9
  $region8: #{_preprocess_impl.1} parent=0 // pred_region
    _
  $region9: #{_preprocess_impl.1} parent=0 // pred_fallthru
    _
  // Predicated region
  $region10: #{_preprocess_impl.1} parent=0 // pred_check
    _
  $region11: #{_preprocess_impl.1} parent=0 // pred_check_branch
    %32 = sbr.rel (0) target = $region13
  $region12: #{_preprocess_impl.1} parent=0 // pred_region
    _
  $region13: #{_preprocess_impl.1} parent=0 // pred_fallthru
    _

</llo_original>
